<compile_context>
chip_gen: v7x
topology: tpu7x:2x2x1
jax: 0.10.0
libtpu: 0.0.40
codegen_flags: <defaults>
</compile_context>

<pallas_src>
import math

import jax
import jax.numpy as jnp
from jax.experimental import pallas as pl
from jax.experimental.pallas import tpu as pltpu


def _make_kernel(b_blk, Lq, Lk, D, d_k, d_v, eps):
    rows_q = b_blk * Lq
    rows_k = b_blk * Lk
    inv_lk = 1.0 / Lk

    def kernel(q_ref, k_ref, v_ref, wq_ref, wk_ref, wv_ref, wfc_ref,
               g_ref, b_ref, o_ref, acc_ref):
        h = pl.program_id(1)

        @pl.when(h == 0)
        def _init():
            acc_ref[...] = jnp.zeros_like(acc_ref)

        cdt = q_ref.dtype          # MXU operand dtype (bf16 in -> bf16 on MXU)

        # Flatten the batch block to rows (leading-dims-only reshape: free).
        q2 = q_ref[...].reshape(rows_q, D)
        k2 = k_ref[...].reshape(rows_k, D)
        v2 = v_ref[...].reshape(rows_k, D)

        # Per-head projections (1/sqrt(d_k) already folded into Wq).
        qh = jnp.dot(q2, wq_ref[0], preferred_element_type=jnp.float32)
        kh = jnp.dot(k2, wk_ref[0], preferred_element_type=jnp.float32)
        vh = jnp.dot(v2, wv_ref[0], preferred_element_type=jnp.float32)

        qh = qh.reshape(b_blk, Lq, d_k).astype(cdt)
        kh = kh.reshape(b_blk, Lk, d_k).astype(cdt)
        vh = vh.reshape(b_blk, Lk, d_v).astype(cdt)

        # Batched q @ k^T over the whole batch block (single dot_general).
        logits = jnp.einsum("bqd,bkd->bqk", qh, kh,
                            preferred_element_type=jnp.float32)

        # Numerically-stable exp; softmax denominator skipped (the AWG gate
        # attn >= mean(attn)  <=>  e >= mean(e), and the final renorm are both
        # invariant to the per-row denominator).
        m = jnp.max(logits, axis=-1, keepdims=True)
        e = jnp.exp(logits - m)
        mean_e = jnp.sum(e, axis=-1, keepdims=True) * inv_lk
        w = jnp.where(e >= mean_e, e, 0.0)
        denom = jnp.sum(w, axis=-1, keepdims=True)   # > 0: max element passes

        # Unnormalized P @ V, then one reciprocal-multiply renorm on the
        # (b, Lq, d_v) context -- cheaper than renormalizing (b, Lq, Lk) w.
        ctx = jnp.einsum("bqk,bkd->bqd", w.astype(cdt), vh,
                         preferred_element_type=jnp.float32)
        ctx = ctx * pl.reciprocal(denom, approx=False)
        # TODO(synk): approx=True (EUP slot) once the tolerance budget allows.

        # Fold this head straight into the output projection: lane-dense
        # accumulation into (rows_q, D); no narrow ctx scratch writes.
        acc_ref[...] += jnp.dot(ctx.reshape(rows_q, d_v).astype(cdt),
                                wfc_ref[0],
                                preferred_element_type=jnp.float32)

        @pl.when(h == pl.num_programs(1) - 1)
        def _finalize():
            out = acc_ref[...] + q2.astype(jnp.float32)          # residual
            mu = jnp.mean(out, axis=-1, keepdims=True)
            var = jnp.mean(jnp.square(out - mu), axis=-1, keepdims=True)
            out = (out - mu) * jax.lax.rsqrt(var + eps)
            out = (out * g_ref[...].astype(jnp.float32)
                   + b_ref[...].astype(jnp.float32))
            o_ref[...] = out.reshape(b_blk, Lq, D).astype(o_ref.dtype)

    return kernel


def _pick_batch_block(B, Lq, target_rows=512):
    """Largest divisor of B giving ~target_rows query rows/step, but keeping
    >= 2 grid steps on the batch axis when possible (pipelining; v7x cores)."""
    bb = max(1, min(B, max(1, target_rows // max(Lq, 1))))
    while B % bb:
        bb -= 1
    while B // bb < 2 and bb > 1:
        bb = max(1, bb // 2)
        while B % bb:
            bb -= 1
    return bb


def _vmem_limit_bytes(b_blk, Lq, Lk, D, d_k, d_v, itemsize):
    rows_q, rows_k = b_blk * Lq, b_blk * Lk
    # Double-buffered pipeline blocks (q/k/v inputs + output).
    blocks = 2 * (rows_q * D + 2 * rows_k * D + rows_q * D) * itemsize
    weights = 2 * (2 * D * d_k + D * d_v + d_v * D + 2 * D) * itemsize
    acc = rows_q * D * 4
    # f32 temporaries: logits/e/w, per-head q/k/v, ctx, finalize slab.
    temps = (3 * b_blk * Lq * Lk + rows_q * d_k + rows_k * (d_k + d_v)
             + rows_q * d_v + 2 * rows_q * D) * 4
    est = blocks + weights + acc + temps
    return int(min(max(2 * est, 16 * 1024 * 1024), 64 * 1024 * 1024))


def cross_attn_awg(q, k, v, wq, wk, wv, wfc, gamma, beta, *,
                   nhead, d_k, d_v, norm_type="mean", l=None, mask=None,
                   eps=1e-6, batch_block=None, core_parallel_batch=False):
    """q/k/v: [B, L, D]; weights pre-transposed to [D_in, D_out]."""
    if mask is not None:
        raise NotImplementedError("attention mask path not implemented")
    if norm_type != "mean":
        raise NotImplementedError("only norm_type='mean' AWG gating implemented")

    B, Lq, D = q.shape
    _, Lk, _ = k.shape
    assert v.shape[1] == Lk

    b_blk = _pick_batch_block(B, Lq) if batch_block is None else batch_block
    assert B % b_blk == 0
    nblk = B // b_blk

    # Host-side weight prep: head-major layout so the kernel never lane-slices
    # a packed (D, H*d) slab; 1/sqrt(d_k) folded into Wq once.
    scale = 1.0 / math.sqrt(d_k)
    wq_h = (wq * scale).reshape(D, nhead, d_k).transpose(1, 0, 2).astype(q.dtype)
    wk_h = wk.reshape(D, nhead, d_k).transpose(1, 0, 2).astype(q.dtype)
    wv_h = wv.reshape(D, nhead, d_v).transpose(1, 0, 2).astype(q.dtype)
    wfc_h = wfc.reshape(nhead, d_v, D).astype(q.dtype)
    gamma2 = gamma.reshape(1, D)
    beta2 = beta.reshape(1, D)

    kernel = _make_kernel(b_blk, Lq, Lk, D, d_k, d_v, eps)

    # On v7x set core_parallel_batch=True to shard batch blocks across the
    # two TensorCores; default stays portable across v5e/v6e.
    batch_sem = pltpu.CORE_PARALLEL if core_parallel_batch else pltpu.PARALLEL
    vmem_limit = _vmem_limit_bytes(b_blk, Lq, Lk, D, d_k, d_v,
                                   jnp.dtype(q.dtype).itemsize)

    out = pl.pallas_call(
        kernel,
        out_shape=jax.ShapeDtypeStruct((B, Lq, D), q.dtype),
        grid_spec=pltpu.PrefetchScalarGridSpec(
            num_scalar_prefetch=0,
            grid=(nblk, nhead),                     # head axis = accumulation
            in_specs=[
                pl.BlockSpec((b_blk, Lq, D), lambda i, h: (i, 0, 0)),   # q
                pl.BlockSpec((b_blk, Lk, D), lambda i, h: (i, 0, 0)),   # k
                pl.BlockSpec((b_blk, Lk, D), lambda i, h: (i, 0, 0)),   # v
                pl.BlockSpec((1, D, d_k), lambda i, h: (h, 0, 0)),      # Wq[h]
                pl.BlockSpec((1, D, d_k), lambda i, h: (h, 0, 0)),      # Wk[h]
                pl.BlockSpec((1, D, d_v), lambda i, h: (h, 0, 0)),      # Wv[h]
                pl.BlockSpec((1, d_v, D), lambda i, h: (h, 0, 0)),      # Wfc[h]
                pl.BlockSpec((1, D), lambda i, h: (0, 0)),              # gamma
                pl.BlockSpec((1, D), lambda i, h: (0, 0)),              # beta
            ],
            out_specs=pl.BlockSpec((b_blk, Lq, D), lambda i, h: (i, 0, 0)),
            scratch_shapes=[pltpu.VMEM((b_blk * Lq, D), jnp.float32)],
        ),
        compiler_params=pltpu.CompilerParams(
            dimension_semantics=(batch_sem, pltpu.ARBITRARY),
            vmem_limit_bytes=vmem_limit),
    )(q, k, v, wq_h, wk_h, wv_h, wfc_h, gamma2, beta2)

    return out


def _reference(q, k, v, wq, wk, wv, wfc, gamma, beta, *, nhead, d_k, d_v,
               eps=1e-6):
    """Pure-JAX reference mirroring the PyTorch forward (norm_type='mean')."""
    B, Lq, D = q.shape
    residual = q
    qp = (q @ wq).reshape(B, Lq, nhead, d_k).transpose(0, 2, 1, 3)
    kp = (k @ wk).reshape(B, k.shape[1], nhead, d_k).transpose(0, 2, 1, 3)
    vp = (v @ wv).reshape(B, v.shape[1], nhead, d_v).transpose(0, 2, 1, 3)
    attn = jnp.einsum("bhqd,bhkd->bhqk", qp / math.sqrt(d_k), kp)
    attn = jax.nn.softmax(attn, axis=-1)
    mean_w = jnp.mean(attn, axis=-1, keepdims=True)
    w = attn * (attn >= mean_w).astype(attn.dtype)
    w = w / jnp.sum(w, axis=-1, keepdims=True)
    out = jnp.einsum("bhqk,bhkd->bhqd", w, vp)
    out = out.transpose(0, 2, 1, 3).reshape(B, Lq, nhead * d_v)
    out = out @ wfc + residual
    mu = jnp.mean(out, axis=-1, keepdims=True)
    var = jnp.mean(jnp.square(out - mu), axis=-1, keepdims=True)
    return (out - mu) / jnp.sqrt(var + eps) * gamma + beta


if __name__ == "__main__":
    B, L, D = 2, 8, 32
    nhead, d_k, d_v = 4, 8, 8      # module views v with d_k (assumes d_k == d_v)

    key = jax.random.PRNGKey(0)
    ks = jax.random.split(key, 7)
    q = jax.random.normal(ks[0], (B, L, D), jnp.float32)
    k = jax.random.normal(ks[1], (B, L, D), jnp.float32)
    v = jax.random.normal(ks[2], (B, L, D), jnp.float32)

    # Deterministic synthetic parameters (pre-transposed to [in, out]).
    wq = jax.random.normal(ks[3], (D, nhead * d_k), jnp.float32) * 0.1
    wk = jax.random.normal(ks[4], (D, nhead * d_k), jnp.float32) * 0.1
    wv = jax.random.normal(ks[5], (D, nhead * d_v), jnp.float32) * 0.1
    wfc = jax.random.normal(ks[6], (nhead * d_v, D), jnp.float32) * 0.1
    gamma = jnp.ones((D,), jnp.float32)     # LayerNorm default init
    beta = jnp.zeros((D,), jnp.float32)

    out = cross_attn_awg(q, k, v, wq, wk, wv, wfc, gamma, beta,
                         nhead=nhead, d_k=d_k, d_v=d_v, norm_type="mean")
    out = jax.block_until_ready(out)

    ref = _reference(q, k, v, wq, wk, wv, wfc, gamma, beta,
                     nhead=nhead, d_k=d_k, d_v=d_v)
    assert out.shape == (B, L, D)
    assert jnp.allclose(out, ref, atol=1e-4, rtol=1e-4), "mismatch vs JAX reference"
    print("KERNEL_OK")
</pallas_src>

<mosaic_0001>
module attributes {stable_mosaic.version = 11 : i64} {
  func.func @kernel(%arg0: i32, %arg1: i32, %arg2: memref<1x8x32xf32, #tpu.memory_space<vmem>>, %arg3: memref<1x8x32xf32, #tpu.memory_space<vmem>>, %arg4: memref<1x8x32xf32, #tpu.memory_space<vmem>>, %arg5: memref<1x32x8xf32, #tpu.memory_space<vmem>>, %arg6: memref<1x32x8xf32, #tpu.memory_space<vmem>>, %arg7: memref<1x32x8xf32, #tpu.memory_space<vmem>>, %arg8: memref<1x8x32xf32, #tpu.memory_space<vmem>>, %arg9: memref<1x32xf32, #tpu.memory_space<vmem>>, %arg10: memref<1x32xf32, #tpu.memory_space<vmem>>, %arg11: memref<1x8x32xf32, #tpu.memory_space<vmem>>, %arg12: memref<8x32xf32, #tpu.memory_space<vmem>>) attributes {dimension_semantics = [#tpu.dimension_semantics<parallel>, #tpu.dimension_semantics<arbitrary>], iteration_bounds = array<i64: 2, 4>, scalar_prefetch = 0 : i64, scratch_operands = 1 : i64, tpu.core_type = #tpu.core_type<tc>, window_params = [{transform_indices = @transform_0, window_bounds = array<i64: 1, 8, 32>}, {transform_indices = @transform_1, window_bounds = array<i64: 1, 8, 32>}, {transform_indices = @transform_2, window_bounds = array<i64: 1, 8, 32>}, {transform_indices = @transform_3, window_bounds = array<i64: 1, 32, 8>}, {transform_indices = @transform_4, window_bounds = array<i64: 1, 32, 8>}, {transform_indices = @transform_5, window_bounds = array<i64: 1, 32, 8>}, {transform_indices = @transform_6, window_bounds = array<i64: 1, 8, 32>}, {pipeline_mode = #tpu.pipeline_mode<synchronous>, transform_indices = @transform_7, window_bounds = array<i64: 1, 32>}, {pipeline_mode = #tpu.pipeline_mode<synchronous>, transform_indices = @transform_8, window_bounds = array<i64: 1, 32>}, {transform_indices = @transform_9, window_bounds = array<i64: 1, 8, 32>}]} {
    %c0_i32 = arith.constant 0 : i32
    %0 = arith.cmpi eq, %arg1, %c0_i32 : i32
    %1 = arith.extui %0 : i1 to i32
    %c0_i32_0 = arith.constant 0 : i32
    %2 = arith.cmpi ne, %1, %c0_i32_0 : i32
    scf.if %2 {
      %cst_36 = arith.constant 0.000000e+00 : f32
      %51 = vector.broadcast %cst_36 : f32 to vector<8x32xf32>
      %c0_37 = arith.constant 0 : index
      %c0_38 = arith.constant 0 : index
      %52 = vector.load %arg12[%c0_37, %c0_38] : memref<8x32xf32, #tpu.memory_space<vmem>>, vector<8x32xf32>
      tpu.vector_store %arg12[%c0_37, %c0_38], %51 {strides = array<i32>} : memref<8x32xf32, #tpu.memory_space<vmem>>, vector<8x32xf32>,
    } else {
    }
    %c0 = arith.constant 0 : index
    %c0_1 = arith.constant 0 : index
    %c0_2 = arith.constant 0 : index
    %3 = vector.load %arg2[%c0, %c0_1, %c0_2] : memref<1x8x32xf32, #tpu.memory_space<vmem>>, vector<1x8x32xf32>
    %4 = vector.shape_cast %3 : vector<1x8x32xf32> to vector<8x32xf32>
    %c0_3 = arith.constant 0 : index
    %c0_4 = arith.constant 0 : index
    %c0_5 = arith.constant 0 : index
    %5 = vector.load %arg3[%c0_3, %c0_4, %c0_5] : memref<1x8x32xf32, #tpu.memory_space<vmem>>, vector<1x8x32xf32>
    %6 = vector.shape_cast %5 : vector<1x8x32xf32> to vector<8x32xf32>
    %c0_6 = arith.constant 0 : index
    %c0_7 = arith.constant 0 : index
    %c0_8 = arith.constant 0 : index
    %7 = vector.load %arg4[%c0_6, %c0_7, %c0_8] : memref<1x8x32xf32, #tpu.memory_space<vmem>>, vector<1x8x32xf32>
    %8 = vector.shape_cast %7 : vector<1x8x32xf32> to vector<8x32xf32>
    %c0_9 = arith.constant 0 : index
    %c0_10 = arith.constant 0 : index
    %c0_11 = arith.constant 0 : index
    %9 = vector.load %arg5[%c0_9, %c0_10, %c0_11] : memref<1x32x8xf32, #tpu.memory_space<vmem>>, vector<1x32x8xf32>
    %10 = vector.shape_cast %9 : vector<1x32x8xf32> to vector<32x8xf32>
    %cst = arith.constant dense<0.000000e+00> : vector<8x8xf32>
    %11 = tpu.matmul %4, %10, %cst {dimension_numbers = #tpu.dot_dimension_numbers<[1], [0], [0], [1], [0, 0, 1, 1], [], []>} : vector<8x32xf32>, vector<32x8xf32>, vector<8x8xf32> -> vector<8x8xf32>
    %c0_12 = arith.constant 0 : index
    %c0_13 = arith.constant 0 : index
    %c0_14 = arith.constant 0 : index
    %12 = vector.load %arg6[%c0_12, %c0_13, %c0_14] : memref<1x32x8xf32, #tpu.memory_space<vmem>>, vector<1x32x8xf32>
    %13 = vector.shape_cast %12 : vector<1x32x8xf32> to vector<32x8xf32>
    %cst_15 = arith.constant dense<0.000000e+00> : vector<8x8xf32>
    %14 = tpu.matmul %6, %13, %cst_15 {dimension_numbers = #tpu.dot_dimension_numbers<[1], [0], [0], [1], [0, 0, 1, 1], [], []>} : vector<8x32xf32>, vector<32x8xf32>, vector<8x8xf32> -> vector<8x8xf32>
    %c0_16 = arith.constant 0 : index
    %c0_17 = arith.constant 0 : index
    %c0_18 = arith.constant 0 : index
    %15 = vector.load %arg7[%c0_16, %c0_17, %c0_18] : memref<1x32x8xf32, #tpu.memory_space<vmem>>, vector<1x32x8xf32>
    %16 = vector.shape_cast %15 : vector<1x32x8xf32> to vector<32x8xf32>
    %cst_19 = arith.constant dense<0.000000e+00> : vector<8x8xf32>
    %17 = tpu.matmul %8, %16, %cst_19 {dimension_numbers = #tpu.dot_dimension_numbers<[1], [0], [0], [1], [0, 0, 1, 1], [], []>} : vector<8x32xf32>, vector<32x8xf32>, vector<8x8xf32> -> vector<8x8xf32>
    %18 = vector.shape_cast %11 : vector<8x8xf32> to vector<1x8x8xf32>
    %19 = vector.shape_cast %14 : vector<8x8xf32> to vector<1x8x8xf32>
    %20 = vector.shape_cast %17 : vector<8x8xf32> to vector<1x8x8xf32>
    "tpu.trace_start"() <{level = 10 : i32, message = "bqd,bkd->bqk"}> : () -> ()
    %cst_20 = arith.constant dense<0.000000e+00> : vector<1x8x8xf32>
    %21 = tpu.matmul %18, %19, %cst_20 {dimension_numbers = #tpu.dot_dimension_numbers<[2], [2], [1], [1], [0, 0, 0, 1, 1, 1], [0], [0]>} : vector<1x8x8xf32>, vector<1x8x8xf32>, vector<1x8x8xf32> -> vector<1x8x8xf32>
    "tpu.trace_stop"() : () -> ()
    %cst_21 = arith.constant dense<0xFF800000> : vector<1x8xf32>
    %22 = vector.multi_reduction <maximumf>, %21, %cst_21 [2] : vector<1x8x8xf32> to vector<1x8xf32>
    %23 = vector.shape_cast %22 : vector<1x8xf32> to vector<1x8x1xf32>
    %24 = vector.broadcast %23 : vector<1x8x1xf32> to vector<1x8x8xf32>
    %25 = arith.subf %21, %24 : vector<1x8x8xf32>
    %26 = math.exp %25 : vector<1x8x8xf32>
    %cst_22 = arith.constant dense<0.000000e+00> : vector<1x8xf32>
    %27 = vector.multi_reduction <add>, %26, %cst_22 [2] : vector<1x8x8xf32> to vector<1x8xf32>
    %28 = vector.shape_cast %27 : vector<1x8xf32> to vector<1x8x1xf32>
    %cst_23 = arith.constant 1.250000e-01 : f32
    %29 = vector.broadcast %cst_23 : f32 to vector<1x8x1xf32>
    %30 = arith.mulf %28, %29 : vector<1x8x1xf32>
    %31 = vector.broadcast %30 : vector<1x8x1xf32> to vector<1x8x8xf32>
    %32 = arith.cmpf oge, %26, %31 : vector<1x8x8xf32>
    %cst_24 = arith.constant 0.000000e+00 : f32
    %33 = vector.broadcast %cst_24 : f32 to vector<1x8x8xf32>
    %34 = arith.select %32, %26, %33 : vector<1x8x8xi1>, vector<1x8x8xf32>
    %cst_25 = arith.constant dense<0.000000e+00> : vector<1x8xf32>
    %35 = vector.multi_reduction <add>, %34, %cst_25 [2] : vector<1x8x8xf32> to vector<1x8xf32>
    %36 = vector.shape_cast %35 : vector<1x8xf32> to vector<1x8x1xf32>
    "tpu.trace_start"() <{level = 10 : i32, message = "bqk,bkd->bqd"}> : () -> ()
    %cst_26 = arith.constant dense<0.000000e+00> : vector<1x8x8xf32>
    %37 = tpu.matmul %34, %20, %cst_26 {dimension_numbers = #tpu.dot_dimension_numbers<[2], [1], [1], [2], [0, 0, 0, 1, 1, 2], [0], [0]>} : vector<1x8x8xf32>, vector<1x8x8xf32>, vector<1x8x8xf32> -> vector<1x8x8xf32>
    "tpu.trace_stop"() : () -> ()
    %38 = tpu.reciprocal %36 : vector<1x8x1xf32> -> vector<1x8x1xf32>
    %39 = vector.broadcast %38 : vector<1x8x1xf32> to vector<1x8x8xf32>
    %40 = arith.mulf %37, %39 : vector<1x8x8xf32>
    %c0_27 = arith.constant 0 : index
    %c0_28 = arith.constant 0 : index
    %41 = vector.load %arg12[%c0_27, %c0_28] : memref<8x32xf32, #tpu.memory_space<vmem>>, vector<8x32xf32>
    %42 = vector.shape_cast %40 : vector<1x8x8xf32> to vector<8x8xf32>
    %c0_29 = arith.constant 0 : index
    %c0_30 = arith.constant 0 : index
    %c0_31 = arith.constant 0 : index
    %43 = vector.load %arg8[%c0_29, %c0_30, %c0_31] : memref<1x8x32xf32, #tpu.memory_space<vmem>>, vector<1x8x32xf32>
    %44 = vector.shape_cast %43 : vector<1x8x32xf32> to vector<8x32xf32>
    %cst_32 = arith.constant dense<0.000000e+00> : vector<8x32xf32>
    %45 = tpu.matmul %42, %44, %cst_32 {dimension_numbers = #tpu.dot_dimension_numbers<[1], [0], [0], [1], [0, 0, 1, 1], [], []>} : vector<8x8xf32>, vector<8x32xf32>, vector<8x32xf32> -> vector<8x32xf32>
    %46 = arith.addf %41, %45 : vector<8x32xf32>
    %c0_33 = arith.constant 0 : index
    %c0_34 = arith.constant 0 : index
    %47 = vector.load %arg12[%c0_33, %c0_34] : memref<8x32xf32, #tpu.memory_space<vmem>>, vector<8x32xf32>
    tpu.vector_store %arg12[%c0_33, %c0_34], %46 {strides = array<i32>} : memref<8x32xf32, #tpu.memory_space<vmem>>, vector<8x32xf32>,
    %c3_i32 = arith.constant 3 : i32
    %48 = arith.cmpi eq, %arg1, %c3_i32 : i32
    %49 = arith.extui %48 : i1 to i32
    %c0_i32_35 = arith.constant 0 : i32
    %50 = arith.cmpi ne, %49, %c0_i32_35 : i32
    scf.if %50 {
      %c0_36 = arith.constant 0 : index
      %c0_37 = arith.constant 0 : index
      %51 = vector.load %arg12[%c0_36, %c0_37] : memref<8x32xf32, #tpu.memory_space<vmem>>, vector<8x32xf32>
      %52 = arith.addf %51, %4 : vector<8x32xf32>
      %cst_38 = arith.constant dense<0.000000e+00> : vector<8xf32>
      %53 = vector.multi_reduction <add>, %52, %cst_38 [1] : vector<8x32xf32> to vector<8xf32>
      %54 = vector.shape_cast %53 : vector<8xf32> to vector<8x1xf32>
      %cst_39 = arith.constant 3.200000e+01 : f32
      %55 = vector.broadcast %cst_39 : f32 to vector<8x1xf32>
      %56 = arith.divf %54, %55 : vector<8x1xf32>
      %57 = vector.broadcast %56 : vector<8x1xf32> to vector<8x32xf32>
      %58 = arith.subf %52, %57 : vector<8x32xf32>
      %59 = arith.mulf %58, %58 : vector<8x32xf32>
      %cst_40 = arith.constant dense<0.000000e+00> : vector<8xf32>
      %60 = vector.multi_reduction <add>, %59, %cst_40 [1] : vector<8x32xf32> to vector<8xf32>
      %61 = vector.shape_cast %60 : vector<8xf32> to vector<8x1xf32>
      %cst_41 = arith.constant 3.200000e+01 : f32
      %62 = vector.broadcast %cst_41 : f32 to vector<8x1xf32>
      %63 = arith.divf %61, %62 : vector<8x1xf32>
      %64 = vector.broadcast %56 : vector<8x1xf32> to vector<8x32xf32>
      %65 = arith.subf %52, %64 : vector<8x32xf32>
      %cst_42 = arith.constant 9.99999997E-7 : f32
      %66 = vector.broadcast %cst_42 : f32 to vector<8x1xf32>
      %67 = arith.addf %63, %66 : vector<8x1xf32>
      %68 = math.rsqrt %67 : vector<8x1xf32>
      %69 = vector.broadcast %68 : vector<8x1xf32> to vector<8x32xf32>
      %70 = arith.mulf %65, %69 : vector<8x32xf32>
      %c0_43 = arith.constant 0 : index
      %c0_44 = arith.constant 0 : index
      %71 = vector.load %arg9[%c0_43, %c0_44] : memref<1x32xf32, #tpu.memory_space<vmem>>, vector<1x32xf32>
      %72 = vector.broadcast %71 : vector<1x32xf32> to vector<8x32xf32>
      %73 = arith.mulf %70, %72 : vector<8x32xf32>
      %c0_45 = arith.constant 0 : index
      %c0_46 = arith.constant 0 : index
      %74 = vector.load %arg10[%c0_45, %c0_46] : memref<1x32xf32, #tpu.memory_space<vmem>>, vector<1x32xf32>
      %75 = vector.broadcast %74 : vector<1x32xf32> to vector<8x32xf32>
      %76 = arith.addf %73, %75 : vector<8x32xf32>
      %77 = vector.shape_cast %76 : vector<8x32xf32> to vector<1x8x32xf32>
      %c0_47 = arith.constant 0 : index
      %c0_48 = arith.constant 0 : index
      %c0_49 = arith.constant 0 : index
      %78 = vector.load %arg11[%c0_47, %c0_48, %c0_49] : memref<1x8x32xf32, #tpu.memory_space<vmem>>, vector<1x8x32xf32>
      tpu.vector_store %arg11[%c0_47, %c0_48, %c0_49], %77 {strides = array<i32>} : memref<1x8x32xf32, #tpu.memory_space<vmem>>, vector<1x8x32xf32>,
    } else {
    }
    return
  }
  func.func @transform_0(%arg0: i32, %arg1: i32) -> (i32, i32, i32) {
    %c0_i32 = arith.constant 0 : i32
    %c0_i32_0 = arith.constant 0 : i32
    %c0_i32_1 = arith.constant 0 : i32
    return %arg0, %c0_i32, %c0_i32_0 : i32, i32, i32
  }
  func.func @transform_1(%arg0: i32, %arg1: i32) -> (i32, i32, i32) {
    %c0_i32 = arith.constant 0 : i32
    %c0_i32_0 = arith.constant 0 : i32
    %c0_i32_1 = arith.constant 0 : i32
    return %arg0, %c0_i32, %c0_i32_0 : i32, i32, i32
  }
  func.func @transform_2(%arg0: i32, %arg1: i32) -> (i32, i32, i32) {
    %c0_i32 = arith.constant 0 : i32
    %c0_i32_0 = arith.constant 0 : i32
    %c0_i32_1 = arith.constant 0 : i32
    return %arg0, %c0_i32, %c0_i32_0 : i32, i32, i32
  }
  func.func @transform_3(%arg0: i32, %arg1: i32) -> (i32, i32, i32) {
    %c0_i32 = arith.constant 0 : i32
    %c0_i32_0 = arith.constant 0 : i32
    %c0_i32_1 = arith.constant 0 : i32
    return %arg1, %c0_i32, %c0_i32_0 : i32, i32, i32
  }
  func.func @transform_4(%arg0: i32, %arg1: i32) -> (i32, i32, i32) {
    %c0_i32 = arith.constant 0 : i32
    %c0_i32_0 = arith.constant 0 : i32
    %c0_i32_1 = arith.constant 0 : i32
    return %arg1, %c0_i32, %c0_i32_0 : i32, i32, i32
  }
  func.func @transform_5(%arg0: i32, %arg1: i32) -> (i32, i32, i32) {
    %c0_i32 = arith.constant 0 : i32
    %c0_i32_0 = arith.constant 0 : i32
    %c0_i32_1 = arith.constant 0 : i32
    return %arg1, %c0_i32, %c0_i32_0 : i32, i32, i32
  }
  func.func @transform_6(%arg0: i32, %arg1: i32) -> (i32, i32, i32) {
    %c0_i32 = arith.constant 0 : i32
    %c0_i32_0 = arith.constant 0 : i32
    %c0_i32_1 = arith.constant 0 : i32
    return %arg1, %c0_i32, %c0_i32_0 : i32, i32, i32
  }
  func.func @transform_7(%arg0: i32, %arg1: i32) -> (i32, i32) {
    %c0_i32 = arith.constant 0 : i32
    %c0_i32_0 = arith.constant 0 : i32
    %c0_i32_1 = arith.constant 0 : i32
    return %c0_i32, %c0_i32_0 : i32, i32
  }
  func.func @transform_8(%arg0: i32, %arg1: i32) -> (i32, i32) {
    %c0_i32 = arith.constant 0 : i32
    %c0_i32_0 = arith.constant 0 : i32
    %c0_i32_1 = arith.constant 0 : i32
    return %c0_i32, %c0_i32_0 : i32, i32
  }
  func.func @transform_9(%arg0: i32, %arg1: i32) -> (i32, i32, i32) {
    %c0_i32 = arith.constant 0 : i32
    %c0_i32_0 = arith.constant 0 : i32
    %c0_i32_1 = arith.constant 0 : i32
    return %arg0, %c0_i32, %c0_i32_0 : i32, i32, i32
  }
}

</mosaic_0001>

<llo_original>
// kernel: tpu_custom_call.1
$region0: #{tpu_custom_call.1}
  #allocation0 [shape = 'u32[]', space=smem, size = 0x4, offset = 0x4, fixed_abs, tag = 'smem constant byte address 0x4 - core index']
  #allocation1 [shape = 'u32[144,128]{1,0:T(1,128)}', space=vmem, size = 0x12000, scoped, tag = 'internal scratch']
  #allocation2 [shape = 'f32[8,32]{1,0:T(8,128)}', space=vmem, size = 0x1000, scoped, tag = 'scratch operand']
  %s0 = inlined_call_operand.vmem [shape: f32[2,8,32], index: 0, kind: input, shape index: {}]
  %s1 = inlined_call_operand.vmem [shape: f32[2,8,32], index: 1, kind: input, shape index: {}]
  %s2 = inlined_call_operand.vmem [shape: f32[2,8,32], index: 2, kind: input, shape index: {}]
  %s3 = inlined_call_operand.vmem [shape: f32[4,32,8], index: 3, kind: input, shape index: {}]
  %s4 = inlined_call_operand.vmem [shape: f32[4,32,8], index: 4, kind: input, shape index: {}]
  %s5 = inlined_call_operand.vmem [shape: f32[4,32,8], index: 5, kind: input, shape index: {}]
  %s6 = inlined_call_operand.vmem [shape: f32[4,8,32], index: 6, kind: input, shape index: {}]
  %s7 = inlined_call_operand.vmem [shape: f32[1,32], index: 7, kind: input, shape index: {}]
  %s8 = inlined_call_operand.vmem [shape: f32[1,32], index: 8, kind: input, shape index: {}]
  %s9 = inlined_call_operand.hbm [shape: f32[2,8,32], index: 9, kind: output, shape index: {}]
  %s10 = sld [smem:[#allocation0]]
  $region77: #{tpu_custom_call.1} parent=0
    _
  %s12 = ssub.s32 1, %s10
  %s13 = scalar_select 0, %s12, %s10
  $region1: #{tpu_custom_call.1} parent=0
    #allocation3 [shape = 'u8[8192]{0}', space=vmem, size = 0x2000, scoped, tag = 'output window, operand 0']
    #allocation4 [shape = 's32[2]{0}', space=sflag, size = 0x8, scoped, tag = 'scoped memory for tpu_custom_call.1']
    %14 = vsyncpa [#allocation4], 0
    %s15 = scalar_lea.sflag [#allocation4], 1
    %16 = vsyncpa %s15, 0
    loop: start=0, step=1, limit=10
    $region2: #{tpu_custom_call.1} parent=1 // loop_pre_header
      _
    $region3: #{tpu_custom_call.1} parent=1 // loop_header
      %s18 = sphi 0, %s22
      %p19 = scmp.ge.s32.totalorder %s18, 10
      %s25 = sphi 0, %s37
      %s26 = sphi 0, %s33
      %s27 = sphi 0, %s25
      %s28 = sphi 0, %s26
      %s29 = sphi 0, %s27
      %s30 = sphi 0, %s28
      %s40 = sphi 0, %s42
      %s43 = sphi 0, %s40
      %s44 = sphi 0, %s43
      %s60 = sphi 0, %s44
      %s66 = sphi 0, %s68
      %s69 = sphi 0, %s66
      %s70 = sphi 0, %s69
      %s86 = sphi 0, %s70
      %s92 = sphi 0, %s94
      %s95 = sphi 0, %s92
      %s96 = sphi 0, %s95
      %s112 = sphi 0, %s96
      %s118 = sphi 0, %s120
      %s121 = sphi 0, %s118
      %s122 = sphi 0, %s121
      %s138 = sphi 0, %s122
      %s144 = sphi 0, %s146
      %s147 = sphi 0, %s144
      %s148 = sphi 0, %s147
      %s164 = sphi 0, %s148
      %s170 = sphi 0, %s172
      %s173 = sphi 0, %s170
      %s174 = sphi 0, %s173
      %s190 = sphi 0, %s174
      %s196 = sphi 0, %s198
      %s199 = sphi 0, %s196
      %s200 = sphi 0, %s199
      %s216 = sphi 0, %s200
      %s220 = sphi 0, %s220
      %s222 = sphi 0, %s220
      %s223 = sphi 0, %s222
      %s237 = sphi 0, %s223
      %s241 = sphi 0, %s241
      %s243 = sphi 0, %s241
      %s244 = sphi 0, %s243
      %s258 = sphi 0, %s244
      %s264 = sphi 0, %s266
      %s267 = sphi 0, %s264
      %s268 = sphi 0, %s267
      %s284 = sphi 0, %s268
    $region4: #{tpu_custom_call.1} parent=1 // loop_header_branch
      %21 = sbr.rel (%p19) target = $region8
    $region5: #{tpu_custom_call.1} parent=1 // loop_body
      %s23 = ssub.s32 %s18, 1
      %s24 = ssub.s32 %s18, 2
      %s31 = sadd.s32 1, %s26
      %p32 = scmp.ge.s32.totalorder %s31, 4
      %s33 = scalar_select %p32, 0, %s31
      %s34 = sadd.s32 1, %s25
      %s35 = scalar_select %p32, %s34, %s25
      %p36 = scmp.ge.s32.totalorder %s35, 2
      %s37 = scalar_select %p36, 0, %s35
      %s38 = ssub.s32 %s25, %s37
      %p39 = scmp.eq.s32.totalorder %s38, 0
      %s41 = sadd.s32 %s40, 1
      %s42 = scalar_select %p39, %s40, %s41
      %p45 = pneg %p39
      %p46 = scmp.eq.s32.totalorder %s18, 7
      %p47 = por %p45, %p46
      %p48 = scmp.ne.s32.totalorder %s40, %s43
      %p49 = scmp.eq.s32.totalorder %s18, 0
      %p50 = por %p48, %p49
      %p51 = scmp.ne.s32.totalorder %s40, %s43
      %p52 = scmp.eq.s32.totalorder %s23, 7
      %p53 = por %p51, %p52
      %p54 = scmp.ne.s32.totalorder %s43, %s44
      %p55 = scmp.eq.s32.totalorder %s23, 0
      %p56 = por %p54, %p55
      %p57 = scmp.ne.s32.totalorder %s43, %s44
      %p58 = scmp.eq.s32.totalorder %s24, 7
      %p59 = por %p57, %p58
      %p61 = scmp.ne.s32.totalorder %s44, %s60
      %p62 = scmp.eq.s32.totalorder %s24, 0
      %p63 = por %p61, %p62
      %s64 = ssub.s32 %s25, %s37
      %p65 = scmp.eq.s32.totalorder %s64, 0
      %s67 = sadd.s32 %s66, 1
      %s68 = scalar_select %p65, %s66, %s67
      %p71 = pneg %p65
      %p72 = scmp.eq.s32.totalorder %s18, 7
      %p73 = por %p71, %p72
      %p74 = scmp.ne.s32.totalorder %s66, %s69
      %p75 = scmp.eq.s32.totalorder %s18, 0
      %p76 = por %p74, %p75
      %p77 = scmp.ne.s32.totalorder %s66, %s69
      %p78 = scmp.eq.s32.totalorder %s23, 7
      %p79 = por %p77, %p78
      %p80 = scmp.ne.s32.totalorder %s69, %s70
      %p81 = scmp.eq.s32.totalorder %s23, 0
      %p82 = por %p80, %p81
      %p83 = scmp.ne.s32.totalorder %s69, %s70
      %p84 = scmp.eq.s32.totalorder %s24, 7
      %p85 = por %p83, %p84
      %p87 = scmp.ne.s32.totalorder %s70, %s86
      %p88 = scmp.eq.s32.totalorder %s24, 0
      %p89 = por %p87, %p88
      %s90 = ssub.s32 %s25, %s37
      %p91 = scmp.eq.s32.totalorder %s90, 0
      %s93 = sadd.s32 %s92, 1
      %s94 = scalar_select %p91, %s92, %s93
      %p97 = pneg %p91
      %p98 = scmp.eq.s32.totalorder %s18, 7
      %p99 = por %p97, %p98
      %p100 = scmp.ne.s32.totalorder %s92, %s95
      %p101 = scmp.eq.s32.totalorder %s18, 0
      %p102 = por %p100, %p101
      %p103 = scmp.ne.s32.totalorder %s92, %s95
      %p104 = scmp.eq.s32.totalorder %s23, 7
      %p105 = por %p103, %p104
      %p106 = scmp.ne.s32.totalorder %s95, %s96
      %p107 = scmp.eq.s32.totalorder %s23, 0
      %p108 = por %p106, %p107
      %p109 = scmp.ne.s32.totalorder %s95, %s96
      %p110 = scmp.eq.s32.totalorder %s24, 7
      %p111 = por %p109, %p110
      %p113 = scmp.ne.s32.totalorder %s96, %s112
      %p114 = scmp.eq.s32.totalorder %s24, 0
      %p115 = por %p113, %p114
      %s116 = ssub.s32 %s26, %s33
      %p117 = scmp.eq.s32.totalorder %s116, 0
      %s119 = sadd.s32 %s118, 1
      %s120 = scalar_select %p117, %s118, %s119
      %p123 = pneg %p117
      %p124 = scmp.eq.s32.totalorder %s18, 7
      %p125 = por %p123, %p124
      %p126 = scmp.ne.s32.totalorder %s118, %s121
      %p127 = scmp.eq.s32.totalorder %s18, 0
      %p128 = por %p126, %p127
      %p129 = scmp.ne.s32.totalorder %s118, %s121
      %p130 = scmp.eq.s32.totalorder %s23, 7
      %p131 = por %p129, %p130
      %p132 = scmp.ne.s32.totalorder %s121, %s122
      %p133 = scmp.eq.s32.totalorder %s23, 0
      %p134 = por %p132, %p133
      %p135 = scmp.ne.s32.totalorder %s121, %s122
      %p136 = scmp.eq.s32.totalorder %s24, 7
      %p137 = por %p135, %p136
      %p139 = scmp.ne.s32.totalorder %s122, %s138
      %p140 = scmp.eq.s32.totalorder %s24, 0
      %p141 = por %p139, %p140
      %s142 = ssub.s32 %s26, %s33
      %p143 = scmp.eq.s32.totalorder %s142, 0
      %s145 = sadd.s32 %s144, 1
      %s146 = scalar_select %p143, %s144, %s145
      %p149 = pneg %p143
      %p150 = scmp.eq.s32.totalorder %s18, 7
      %p151 = por %p149, %p150
      %p152 = scmp.ne.s32.totalorder %s144, %s147
      %p153 = scmp.eq.s32.totalorder %s18, 0
      %p154 = por %p152, %p153
      %p155 = scmp.ne.s32.totalorder %s144, %s147
      %p156 = scmp.eq.s32.totalorder %s23, 7
      %p157 = por %p155, %p156
      %p158 = scmp.ne.s32.totalorder %s147, %s148
      %p159 = scmp.eq.s32.totalorder %s23, 0
      %p160 = por %p158, %p159
      %p161 = scmp.ne.s32.totalorder %s147, %s148
      %p162 = scmp.eq.s32.totalorder %s24, 7
      %p163 = por %p161, %p162
      %p165 = scmp.ne.s32.totalorder %s148, %s164
      %p166 = scmp.eq.s32.totalorder %s24, 0
      %p167 = por %p165, %p166
      %s168 = ssub.s32 %s26, %s33
      %p169 = scmp.eq.s32.totalorder %s168, 0
      %s171 = sadd.s32 %s170, 1
      %s172 = scalar_select %p169, %s170, %s171
      %p175 = pneg %p169
      %p176 = scmp.eq.s32.totalorder %s18, 7
      %p177 = por %p175, %p176
      %p178 = scmp.ne.s32.totalorder %s170, %s173
      %p179 = scmp.eq.s32.totalorder %s18, 0
      %p180 = por %p178, %p179
      %p181 = scmp.ne.s32.totalorder %s170, %s173
      %p182 = scmp.eq.s32.totalorder %s23, 7
      %p183 = por %p181, %p182
      %p184 = scmp.ne.s32.totalorder %s173, %s174
      %p185 = scmp.eq.s32.totalorder %s23, 0
      %p186 = por %p184, %p185
      %p187 = scmp.ne.s32.totalorder %s173, %s174
      %p188 = scmp.eq.s32.totalorder %s24, 7
      %p189 = por %p187, %p188
      %p191 = scmp.ne.s32.totalorder %s174, %s190
      %p192 = scmp.eq.s32.totalorder %s24, 0
      %p193 = por %p191, %p192
      %s194 = ssub.s32 %s26, %s33
      %p195 = scmp.eq.s32.totalorder %s194, 0
      %s197 = sadd.s32 %s196, 1
      %s198 = scalar_select %p195, %s196, %s197
      %p201 = pneg %p195
      %p202 = scmp.eq.s32.totalorder %s18, 7
      %p203 = por %p201, %p202
      %p204 = scmp.ne.s32.totalorder %s196, %s199
      %p205 = scmp.eq.s32.totalorder %s18, 0
      %p206 = por %p204, %p205
      %p207 = scmp.ne.s32.totalorder %s196, %s199
      %p208 = scmp.eq.s32.totalorder %s23, 7
      %p209 = por %p207, %p208
      %p210 = scmp.ne.s32.totalorder %s199, %s200
      %p211 = scmp.eq.s32.totalorder %s23, 0
      %p212 = por %p210, %p211
      %p213 = scmp.ne.s32.totalorder %s199, %s200
      %p214 = scmp.eq.s32.totalorder %s24, 7
      %p215 = por %p213, %p214
      %p217 = scmp.ne.s32.totalorder %s200, %s216
      %p218 = scmp.eq.s32.totalorder %s24, 0
      %p219 = por %p217, %p218
      %s221 = sadd.s32 %s220, 1
      %p224 = scmp.eq.s32.totalorder %s18, 7
      %p225 = scmp.ne.s32.totalorder %s220, %s222
      %p226 = scmp.eq.s32.totalorder %s18, 0
      %p227 = por %p225, %p226
      %p228 = scmp.ne.s32.totalorder %s220, %s222
      %p229 = scmp.eq.s32.totalorder %s23, 7
      %p230 = por %p228, %p229
      %p231 = scmp.ne.s32.totalorder %s222, %s223
      %p232 = scmp.eq.s32.totalorder %s23, 0
      %p233 = por %p231, %p232
      %p234 = scmp.ne.s32.totalorder %s222, %s223
      %p235 = scmp.eq.s32.totalorder %s24, 7
      %p236 = por %p234, %p235
      %p238 = scmp.ne.s32.totalorder %s223, %s237
      %p239 = scmp.eq.s32.totalorder %s24, 0
      %p240 = por %p238, %p239
      %s242 = sadd.s32 %s241, 1
      %p245 = scmp.eq.s32.totalorder %s18, 7
      %p246 = scmp.ne.s32.totalorder %s241, %s243
      %p247 = scmp.eq.s32.totalorder %s18, 0
      %p248 = por %p246, %p247
      %p249 = scmp.ne.s32.totalorder %s241, %s243
      %p250 = scmp.eq.s32.totalorder %s23, 7
      %p251 = por %p249, %p250
      %p252 = scmp.ne.s32.totalorder %s243, %s244
      %p253 = scmp.eq.s32.totalorder %s23, 0
      %p254 = por %p252, %p253
      %p255 = scmp.ne.s32.totalorder %s243, %s244
      %p256 = scmp.eq.s32.totalorder %s24, 7
      %p257 = por %p255, %p256
      %p259 = scmp.ne.s32.totalorder %s244, %s258
      %p260 = scmp.eq.s32.totalorder %s24, 0
      %p261 = por %p259, %p260
      %s262 = ssub.s32 %s25, %s37
      %p263 = scmp.eq.s32.totalorder %s262, 0
      %s265 = sadd.s32 %s264, 1
      %s266 = scalar_select %p263, %s264, %s265
      %p269 = pneg %p263
      %p270 = scmp.eq.s32.totalorder %s18, 7
      %p271 = por %p269, %p270
      %p272 = scmp.ne.s32.totalorder %s264, %s267
      %p273 = scmp.eq.s32.totalorder %s18, 0
      %p274 = por %p272, %p273
      %p275 = scmp.ne.s32.totalorder %s264, %s267
      %p276 = scmp.eq.s32.totalorder %s23, 7
      %p277 = por %p275, %p276
      %p278 = scmp.ne.s32.totalorder %s267, %s268
      %p279 = scmp.eq.s32.totalorder %s23, 0
      %p280 = por %p278, %p279
      %p281 = scmp.ne.s32.totalorder %s267, %s268
      %p282 = scmp.eq.s32.totalorder %s24, 7
      %p283 = por %p281, %p282
      %p285 = scmp.ne.s32.totalorder %s268, %s284
      %p286 = scmp.eq.s32.totalorder %s24, 0
      %p287 = por %p285, %p286
      %p288 = scmp.le.s32.totalorder 1, %s18
      %p289 = scmp.lt.s32.totalorder %s18, 9
      %p290 = pnand %p288, %p289
      %p291 = pneg %p290
      // Predicated region
      $region9: #{tpu_custom_call.1} parent=5 // pred_check
        _
      $region10: #{tpu_custom_call.1} parent=5 // pred_check_branch
        %293 = sbr.rel (%p290) target = $region12
      $region11: #{tpu_custom_call.1} parent=5 // pred_region
        %s294 = ssub.s32 %s18, 1
        // Predicated region
        $region13: #{tpu_custom_call.1} parent=11 // pred_check
          %p295 = pneg %p233
        $region14: #{tpu_custom_call.1} parent=11 // pred_check_branch
          %297 = sbr.rel (%p295) target = $region16
        $region15: #{tpu_custom_call.1} parent=11 // pred_region
          _
        $region16: #{tpu_custom_call.1} parent=11 // pred_fallthru
          _
        // Predicated region
        $region17: #{tpu_custom_call.1} parent=11 // pred_check
          %p298 = pneg %p254
        $region18: #{tpu_custom_call.1} parent=11 // pred_check_branch
          %300 = sbr.rel (%p298) target = $region20
        $region19: #{tpu_custom_call.1} parent=11 // pred_region
          _
        $region20: #{tpu_custom_call.1} parent=11 // pred_fallthru
          _
      $region12: #{tpu_custom_call.1} parent=5 // pred_fallthru
        _
      %p301 = scmp.lt.s32.totalorder %s18, 8
      // Predicated region
      $region21: #{tpu_custom_call.1} parent=5 // pred_check
        %p302 = pneg %p301
      $region22: #{tpu_custom_call.1} parent=5 // pred_check_branch
        %304 = sbr.rel (%p302) target = $region24
      $region23: #{tpu_custom_call.1} parent=5 // pred_region
        // Predicated region
        $region25: #{tpu_custom_call.1} parent=23 // pred_check
          %p305 = pneg %p50
        $region26: #{tpu_custom_call.1} parent=23 // pred_check_branch
          %307 = sbr.rel (%p305) target = $region28
        $region27: #{tpu_custom_call.1} parent=23 // pred_region
          %p308 = scmp.lt.s32.totalorder %s25, 1
          %s309 = scalar_select %p308, %s25, 1
          %s310 = smul.addr %s309, 8
          %s311 = scalar_lea.vmem %s0, %s310
        $region28: #{tpu_custom_call.1} parent=23 // pred_fallthru
          _
        // Predicated region
        $region29: #{tpu_custom_call.1} parent=23 // pred_check
          %p312 = pneg %p76
        $region30: #{tpu_custom_call.1} parent=23 // pred_check_branch
          %314 = sbr.rel (%p312) target = $region32
        $region31: #{tpu_custom_call.1} parent=23 // pred_region
          %p315 = scmp.lt.s32.totalorder %s25, 1
          %s316 = scalar_select %p315, %s25, 1
          %s317 = smul.addr %s316, 8
          %s318 = scalar_lea.vmem %s1, %s317
        $region32: #{tpu_custom_call.1} parent=23 // pred_fallthru
          _
        // Predicated region
        $region33: #{tpu_custom_call.1} parent=23 // pred_check
          %p319 = pneg %p102
        $region34: #{tpu_custom_call.1} parent=23 // pred_check_branch
          %321 = sbr.rel (%p319) target = $region36
        $region35: #{tpu_custom_call.1} parent=23 // pred_region
          %p322 = scmp.lt.s32.totalorder %s25, 1
          %s323 = scalar_select %p322, %s25, 1
          %s324 = smul.addr %s323, 8
          %s325 = scalar_lea.vmem %s2, %s324
        $region36: #{tpu_custom_call.1} parent=23 // pred_fallthru
          _
        // Predicated region
        $region37: #{tpu_custom_call.1} parent=23 // pred_check
          %p326 = pneg %p128
        $region38: #{tpu_custom_call.1} parent=23 // pred_check_branch
          %328 = sbr.rel (%p326) target = $region40
        $region39: #{tpu_custom_call.1} parent=23 // pred_region
          %p329 = scmp.lt.s32.totalorder %s26, 3
          %s330 = scalar_select %p329, %s26, 3
          %s331 = smul.addr %s330, 4
          %s332 = smul.addr %s331, 8
          %s333 = scalar_lea.vmem %s3, %s332
        $region40: #{tpu_custom_call.1} parent=23 // pred_fallthru
          _
        // Predicated region
        $region41: #{tpu_custom_call.1} parent=23 // pred_check
          %p334 = pneg %p154
        $region42: #{tpu_custom_call.1} parent=23 // pred_check_branch
          %336 = sbr.rel (%p334) target = $region44
        $region43: #{tpu_custom_call.1} parent=23 // pred_region
          %p337 = scmp.lt.s32.totalorder %s26, 3
          %s338 = scalar_select %p337, %s26, 3
          %s339 = smul.addr %s338, 4
          %s340 = smul.addr %s339, 8
          %s341 = scalar_lea.vmem %s4, %s340
        $region44: #{tpu_custom_call.1} parent=23 // pred_fallthru
          _
        // Predicated region
        $region45: #{tpu_custom_call.1} parent=23 // pred_check
          %p342 = pneg %p180
        $region46: #{tpu_custom_call.1} parent=23 // pred_check_branch
          %344 = sbr.rel (%p342) target = $region48
        $region47: #{tpu_custom_call.1} parent=23 // pred_region
          %p345 = scmp.lt.s32.totalorder %s26, 3
          %s346 = scalar_select %p345, %s26, 3
          %s347 = smul.addr %s346, 4
          %s348 = smul.addr %s347, 8
          %s349 = scalar_lea.vmem %s5, %s348
        $region48: #{tpu_custom_call.1} parent=23 // pred_fallthru
          _
        // Predicated region
        $region49: #{tpu_custom_call.1} parent=23 // pred_check
          %p350 = pneg %p206
        $region50: #{tpu_custom_call.1} parent=23 // pred_check_branch
          %352 = sbr.rel (%p350) target = $region52
        $region51: #{tpu_custom_call.1} parent=23 // pred_region
          %p353 = scmp.lt.s32.totalorder %s26, 3
          %s354 = scalar_select %p353, %s26, 3
          %s355 = smul.addr %s354, 8
          %s356 = scalar_lea.vmem %s6, %s355
        $region52: #{tpu_custom_call.1} parent=23 // pred_fallthru
          _
      $region24: #{tpu_custom_call.1} parent=5 // pred_fallthru
        _
      %p357 = scmp.le.s32.totalorder 1, %s18
      %p358 = scmp.lt.s32.totalorder %s18, 9
      %p359 = pnand %p357, %p358
      %p360 = pneg %p359
      // Predicated region
      $region53: #{tpu_custom_call.1} parent=5 // pred_check
        _
      $region54: #{tpu_custom_call.1} parent=5 // pred_check_branch
        %362 = sbr.rel (%p359) target = $region56
      $region55: #{tpu_custom_call.1} parent=5 // pred_region
        %s363 = ssub.s32 %s18, 1
        %p364 = scmp.lt.s32.totalorder %s27, 1
        %s365 = scalar_select %p364, %s27, 1
        %s366 = smul.addr %s365, 8
        %s367 = scalar_lea.vmem %s0, %s366
        %p368 = pneg %p56
        %p369 = pneg %p53
        %p370 = scmp.lt.s32.totalorder %s27, 1
        %s371 = scalar_select %p370, %s27, 1
        %s372 = smul.addr %s371, 8
        %s373 = scalar_lea.vmem %s1, %s372
        %p374 = pneg %p82
        %p375 = pneg %p79
        %p376 = scmp.lt.s32.totalorder %s27, 1
        %s377 = scalar_select %p376, %s27, 1
        %s378 = smul.addr %s377, 8
        %s379 = scalar_lea.vmem %s2, %s378
        %p380 = pneg %p108
        %p381 = pneg %p105
        %p382 = scmp.lt.s32.totalorder %s28, 3
        %s383 = scalar_select %p382, %s28, 3
        %s384 = smul.addr %s383, 4
        %s385 = smul.addr %s384, 8
        %s386 = scalar_lea.vmem %s3, %s385
        %p387 = pneg %p134
        %p388 = pneg %p131
        %p389 = scmp.lt.s32.totalorder %s28, 3
        %s390 = scalar_select %p389, %s28, 3
        %s391 = smul.addr %s390, 4
        %s392 = smul.addr %s391, 8
        %s393 = scalar_lea.vmem %s4, %s392
        %p394 = pneg %p160
        %p395 = pneg %p157
        %p396 = scmp.lt.s32.totalorder %s28, 3
        %s397 = scalar_select %p396, %s28, 3
        %s398 = smul.addr %s397, 4
        %s399 = smul.addr %s398, 8
        %s400 = scalar_lea.vmem %s5, %s399
        %p401 = pneg %p186
        %p402 = pneg %p183
        %p403 = scmp.lt.s32.totalorder %s28, 3
        %s404 = scalar_select %p403, %s28, 3
        %s405 = smul.addr %s404, 8
        %s406 = scalar_lea.vmem %s6, %s405
        %p407 = pneg %p212
        %p408 = pneg %p209
        %p409 = pneg %p233
        %p410 = pneg %p230
        %p411 = pneg %p254
        %p412 = pneg %p251
        %p413 = pneg %p280
        %p414 = pneg %p277
        %s415 = sand.u32 %s267, 1
        %s416 = scalar_lea.sflag [#allocation4], %s415
        %s417 = sand.u32 %s267, 1
        %s418 = smul.addr %s417, 8
        %s419 = scalar_lea.vmem [#allocation3], %s418
        %p420 = scmp.lt.s32.totalorder %s27, 1
        %s421 = scalar_select %p420, %s27, 1
        %s422 = smul.addr %s421, 8
        %s423 = scalar_lea.vmem %s0, %s422
        %p424 = scmp.lt.s32.totalorder %s27, 1
        %s425 = scalar_select %p424, %s27, 1
        %s426 = smul.addr %s425, 8
        %s427 = scalar_lea.vmem %s1, %s426
        %p428 = scmp.lt.s32.totalorder %s27, 1
        %s429 = scalar_select %p428, %s27, 1
        %s430 = smul.addr %s429, 8
        %s431 = scalar_lea.vmem %s2, %s430
        %p432 = scmp.lt.s32.totalorder %s28, 3
        %s433 = scalar_select %p432, %s28, 3
        %s434 = smul.addr %s433, 4
        %s435 = smul.addr %s434, 8
        %s436 = scalar_lea.vmem %s3, %s435
        %p437 = scmp.lt.s32.totalorder %s28, 3
        %s438 = scalar_select %p437, %s28, 3
        %s439 = smul.addr %s438, 4
        %s440 = smul.addr %s439, 8
        %s441 = scalar_lea.vmem %s4, %s440
        %p442 = scmp.lt.s32.totalorder %s28, 3
        %s443 = scalar_select %p442, %s28, 3
        %s444 = smul.addr %s443, 4
        %s445 = smul.addr %s444, 8
        %s446 = scalar_lea.vmem %s5, %s445
        %p447 = scmp.lt.s32.totalorder %s28, 3
        %s448 = scalar_select %p447, %s28, 3
        %s449 = smul.addr %s448, 8
        %s450 = scalar_lea.vmem %s6, %s449
        %p451 = scmp.eq.s32.totalorder %s28, 0
        // Predicated region
        $region57: #{tpu_custom_call.1} parent=55 // pred_check
          %p452 = pneg %p451
        $region58: #{tpu_custom_call.1} parent=55 // pred_check_branch
          %454 = sbr.rel (%p452) target = $region60
        $region59: #{tpu_custom_call.1} parent=55 // pred_region
          %vm455 = vcmask 261120
          %456 = vst.msk [vmem:[#allocation2] sm:$0xff] %vm455, 0.0
        $region60: #{tpu_custom_call.1} parent=55 // pred_fallthru
          _
        %v457 = vld [vmem:[%s423] sm:$0xff]
        %v458 = vld [vmem:[%s427] sm:$0xff]
        %v459 = vld [vmem:[%s431] sm:$0xff]
        %v460 = vld [vmem:[%s436] sm:$0xff]
        %v461 = vld [vmem:[%s436 + $0x8] sm:$0xff]
        %v462 = vld [vmem:[%s436 + $0x10] sm:$0xff]
        %v463 = vld [vmem:[%s436 + $0x18] sm:$0xff]
        %vm464 = vcmask 261120
        %v466 = vsel %vm464, %v457, 0
        %468 = vmatprep.subr.mxu0 0.0
        %469 = vmatpush1.msra.mxu0 %v460
        %470 = vmatprep.subr.mxu0 0.0
        %471 = vmatpush1.msra.mxu0 %v461
        %472 = vmatprep.subr.mxu0 0.0
        %473 = vmatpush1.msra.mxu0 %v462
        %474 = vmatprep.subr.mxu0 0.0
        %475 = vmatpush1.msra.mxu0 %v463
        %476 = vmatprep.subr.mxu0 0.0
        %477 = vmatpush1.msra.mxu0 0.0
        %478 = vmatprep.subr.mxu0 0.0
        %479 = vmatpush1.msra.mxu0 0.0
        %480 = vmatprep.subr.mxu0 0.0
        %481 = vmatpush1.msra.mxu0 0.0
        %482 = vmatprep.subr.mxu0 0.0
        %483 = vmatpush1.msra.mxu0 0.0
        %484 = vmatprep.subr.mxu0 0.0
        %485 = vmatpush1.msra.mxu0 0.0
        %486 = vmatprep.subr.mxu0 0.0
        %487 = vmatpush1.msra.mxu0 0.0
        %488 = vmatprep.subr.mxu0 0.0
        %489 = vmatpush1.msra.mxu0 0.0
        %490 = vmatprep.subr.mxu0 0.0
        %491 = vmatpush1.msra.mxu0 0.0
        %492 = vmatprep.subr.mxu0 0.0
        %493 = vmatpush1.msra.mxu0 0.0
        %494 = vmatprep.subr.mxu0 0.0
        %495 = vmatpush1.msra.mxu0 0.0
        %496 = vmatprep.subr.mxu0 0.0
        %497 = vmatpush1.msra.mxu0 0.0
        %498 = vmatprep.subr.mxu0 0.0
        %499 = vmatpush1.msra.mxu0 0.0
        %500 = vmatprep.subr.mxu0 0.0
        %501 = vmatpush1.msra.mxu0 0.0
        %502 = vmatprep.subr.mxu0 0.0
        %503 = vmatpush1.msra.mxu0 0.0
        %504 = vmatprep.subr.mxu0 0.0
        %505 = vmatpush1.msra.mxu0 0.0
        %506 = vmatprep.subr.mxu0 0.0
        %507 = vmatpush1.msra.mxu0 0.0
        %508 = vmatprep.subr.mxu0 0.0
        %509 = vmatpush1.msra.mxu0 0.0
        %510 = vmatprep.subr.mxu0 0.0
        %511 = vmatpush1.msra.mxu0 0.0
        %512 = vmatprep.subr.mxu0 0.0
        %513 = vmatpush1.msra.mxu0 0.0
        %514 = vmatprep.subr.mxu0 0.0
        %515 = vmatpush1.msra.mxu0 0.0
        %516 = vmatprep.subr.mxu0 0.0
        %517 = vmatpush1.msra.mxu0 0.0
        %518 = vmatprep.subr.mxu0 0.0
        %519 = vmatpush1.msra.mxu0 0.0
        %520 = vmatprep.subr.mxu0 0.0
        %521 = vmatpush1.msra.mxu0 0.0
        %522 = vmatprep.subr.mxu0 0.0
        %523 = vmatpush1.msra.mxu0 0.0
        %524 = vmatprep.subr.mxu0 0.0
        %525 = vmatpush1.msra.mxu0 0.0
        %526 = vmatprep.subr.mxu0 0.0
        %527 = vmatpush1.msra.mxu0 0.0
        %528 = vmatprep.subr.mxu0 0.0
        %529 = vmatpush1.msra.mxu0 0.0
        %530 = vmatprep.subr.mxu0 0.0
        %531 = vmatpush1.msra.mxu0 0.0
        %532 = vmatprep.mubr.f32.mxu0 0.0
        %533 = vmatmul.mubr.f32.gmra.mrb[0].mxu0 %v466
        %v534 = vpop.f32.mrb[0].mxu0
        %v535 = vadd.f32 0.0, %v534
        %v536 = vpop.f32.mrb[0].mxu0
        %537 = vdwg.mxu0
        %v538 = vld [vmem:[%s441] sm:$0xff]
        %v539 = vld [vmem:[%s441 + $0x8] sm:$0xff]
        %v540 = vld [vmem:[%s441 + $0x10] sm:$0xff]
        %v541 = vld [vmem:[%s441 + $0x18] sm:$0xff]
        %v543 = vsel %vm464, %v458, 0
        %545 = vmatprep.subr.mxu0 0.0
        %546 = vmatpush1.msra.mxu0 %v538
        %547 = vmatprep.subr.mxu0 0.0
        %548 = vmatpush1.msra.mxu0 %v539
        %549 = vmatprep.subr.mxu0 0.0
        %550 = vmatpush1.msra.mxu0 %v540
        %551 = vmatprep.subr.mxu0 0.0
        %552 = vmatpush1.msra.mxu0 %v541
        %553 = vmatprep.subr.mxu0 0.0
        %554 = vmatpush1.msra.mxu0 0.0
        %555 = vmatprep.subr.mxu0 0.0
        %556 = vmatpush1.msra.mxu0 0.0
        %557 = vmatprep.subr.mxu0 0.0
        %558 = vmatpush1.msra.mxu0 0.0
        %559 = vmatprep.subr.mxu0 0.0
        %560 = vmatpush1.msra.mxu0 0.0
        %561 = vmatprep.subr.mxu0 0.0
        %562 = vmatpush1.msra.mxu0 0.0
        %563 = vmatprep.subr.mxu0 0.0
        %564 = vmatpush1.msra.mxu0 0.0
        %565 = vmatprep.subr.mxu0 0.0
        %566 = vmatpush1.msra.mxu0 0.0
        %567 = vmatprep.subr.mxu0 0.0
        %568 = vmatpush1.msra.mxu0 0.0
        %569 = vmatprep.subr.mxu0 0.0
        %570 = vmatpush1.msra.mxu0 0.0
        %571 = vmatprep.subr.mxu0 0.0
        %572 = vmatpush1.msra.mxu0 0.0
        %573 = vmatprep.subr.mxu0 0.0
        %574 = vmatpush1.msra.mxu0 0.0
        %575 = vmatprep.subr.mxu0 0.0
        %576 = vmatpush1.msra.mxu0 0.0
        %577 = vmatprep.subr.mxu0 0.0
        %578 = vmatpush1.msra.mxu0 0.0
        %579 = vmatprep.subr.mxu0 0.0
        %580 = vmatpush1.msra.mxu0 0.0
        %581 = vmatprep.subr.mxu0 0.0
        %582 = vmatpush1.msra.mxu0 0.0
        %583 = vmatprep.subr.mxu0 0.0
        %584 = vmatpush1.msra.mxu0 0.0
        %585 = vmatprep.subr.mxu0 0.0
        %586 = vmatpush1.msra.mxu0 0.0
        %587 = vmatprep.subr.mxu0 0.0
        %588 = vmatpush1.msra.mxu0 0.0
        %589 = vmatprep.subr.mxu0 0.0
        %590 = vmatpush1.msra.mxu0 0.0
        %591 = vmatprep.subr.mxu0 0.0
        %592 = vmatpush1.msra.mxu0 0.0
        %593 = vmatprep.subr.mxu0 0.0
        %594 = vmatpush1.msra.mxu0 0.0
        %595 = vmatprep.subr.mxu0 0.0
        %596 = vmatpush1.msra.mxu0 0.0
        %597 = vmatprep.subr.mxu0 0.0
        %598 = vmatpush1.msra.mxu0 0.0
        %599 = vmatprep.subr.mxu0 0.0
        %600 = vmatpush1.msra.mxu0 0.0
        %601 = vmatprep.subr.mxu0 0.0
        %602 = vmatpush1.msra.mxu0 0.0
        %603 = vmatprep.subr.mxu0 0.0
        %604 = vmatpush1.msra.mxu0 0.0
        %605 = vmatprep.subr.mxu0 0.0
        %606 = vmatpush1.msra.mxu0 0.0
        %607 = vmatprep.subr.mxu0 0.0
        %608 = vmatpush1.msra.mxu0 0.0
        %609 = vmatprep.mubr.f32.mxu0 0.0
        %610 = vmatmul.mubr.f32.gmra.mrb[0].mxu0 %v543
        %v611 = vpop.f32.mrb[0].mxu0
        %v612 = vadd.f32 0.0, %v611
        %v613 = vpop.f32.mrb[0].mxu0
        %614 = vdwg.mxu0
        %v615 = vld [vmem:[%s446] sm:$0xff]
        %v616 = vld [vmem:[%s446 + $0x8] sm:$0xff]
        %v617 = vld [vmem:[%s446 + $0x10] sm:$0xff]
        %v618 = vld [vmem:[%s446 + $0x18] sm:$0xff]
        %v620 = vsel %vm464, %v459, 0
        %622 = vmatprep.subr.mxu0 0.0
        %623 = vmatpush1.msra.mxu0 %v615
        %624 = vmatprep.subr.mxu0 0.0
        %625 = vmatpush1.msra.mxu0 %v616
        %626 = vmatprep.subr.mxu0 0.0
        %627 = vmatpush1.msra.mxu0 %v617
        %628 = vmatprep.subr.mxu0 0.0
        %629 = vmatpush1.msra.mxu0 %v618
        %630 = vmatprep.subr.mxu0 0.0
        %631 = vmatpush1.msra.mxu0 0.0
        %632 = vmatprep.subr.mxu0 0.0
        %633 = vmatpush1.msra.mxu0 0.0
        %634 = vmatprep.subr.mxu0 0.0
        %635 = vmatpush1.msra.mxu0 0.0
        %636 = vmatprep.subr.mxu0 0.0
        %637 = vmatpush1.msra.mxu0 0.0
        %638 = vmatprep.subr.mxu0 0.0
        %639 = vmatpush1.msra.mxu0 0.0
        %640 = vmatprep.subr.mxu0 0.0
        %641 = vmatpush1.msra.mxu0 0.0
        %642 = vmatprep.subr.mxu0 0.0
        %643 = vmatpush1.msra.mxu0 0.0
        %644 = vmatprep.subr.mxu0 0.0
        %645 = vmatpush1.msra.mxu0 0.0
        %646 = vmatprep.subr.mxu0 0.0
        %647 = vmatpush1.msra.mxu0 0.0
        %648 = vmatprep.subr.mxu0 0.0
        %649 = vmatpush1.msra.mxu0 0.0
        %650 = vmatprep.subr.mxu0 0.0
        %651 = vmatpush1.msra.mxu0 0.0
        %652 = vmatprep.subr.mxu0 0.0
        %653 = vmatpush1.msra.mxu0 0.0
        %654 = vmatprep.subr.mxu0 0.0
        %655 = vmatpush1.msra.mxu0 0.0
        %656 = vmatprep.subr.mxu0 0.0
        %657 = vmatpush1.msra.mxu0 0.0
        %658 = vmatprep.subr.mxu0 0.0
        %659 = vmatpush1.msra.mxu0 0.0
        %660 = vmatprep.subr.mxu0 0.0
        %661 = vmatpush1.msra.mxu0 0.0
        %662 = vmatprep.subr.mxu0 0.0
        %663 = vmatpush1.msra.mxu0 0.0
        %664 = vmatprep.subr.mxu0 0.0
        %665 = vmatpush1.msra.mxu0 0.0
        %666 = vmatprep.subr.mxu0 0.0
        %667 = vmatpush1.msra.mxu0 0.0
        %668 = vmatprep.subr.mxu0 0.0
        %669 = vmatpush1.msra.mxu0 0.0
        %670 = vmatprep.subr.mxu0 0.0
        %671 = vmatpush1.msra.mxu0 0.0
        %672 = vmatprep.subr.mxu0 0.0
        %673 = vmatpush1.msra.mxu0 0.0
        %674 = vmatprep.subr.mxu0 0.0
        %675 = vmatpush1.msra.mxu0 0.0
        %676 = vmatprep.subr.mxu0 0.0
        %677 = vmatpush1.msra.mxu0 0.0
        %678 = vmatprep.subr.mxu0 0.0
        %679 = vmatpush1.msra.mxu0 0.0
        %680 = vmatprep.subr.mxu0 0.0
        %681 = vmatpush1.msra.mxu0 0.0
        %682 = vmatprep.subr.mxu0 0.0
        %683 = vmatpush1.msra.mxu0 0.0
        %684 = vmatprep.subr.mxu0 0.0
        %685 = vmatpush1.msra.mxu0 0.0
        %686 = vmatprep.mubr.f32.mxu0 0.0
        %687 = vmatmul.mubr.f32.gmra.mrb[0].mxu0 %v620
        %v688 = vpop.f32.mrb[0].mxu0
        %v689 = vadd.f32 0.0, %v688
        %v690 = vpop.f32.mrb[0].mxu0
        %691 = vdwg.mxu0
        %vm692 = vcmask 64512
        %v694 = vsel %vm692, %v535, 0
        %v697 = vsel %vm692, %v612, 0
        %699 = vmatprep.subr.mxu0 0.0
        %700 = vmatpush1.xpose.msra.mxu0 %v697
        %701 = vmatprep.subr.mxu0 0.0
        %702 = vmatpush1.xpose.msra.mxu0 0.0
        %703 = vmatprep.subr.mxu0 0.0
        %704 = vmatpush1.xpose.msra.mxu0 0.0
        %705 = vmatprep.subr.mxu0 0.0
        %706 = vmatpush1.xpose.msra.mxu0 0.0
        %707 = vmatprep.subr.mxu0 0.0
        %708 = vmatpush1.xpose.msra.mxu0 0.0
        %709 = vmatprep.subr.mxu0 0.0
        %710 = vmatpush1.xpose.msra.mxu0 0.0
        %711 = vmatprep.subr.mxu0 0.0
        %712 = vmatpush1.xpose.msra.mxu0 0.0
        %713 = vmatprep.subr.mxu0 0.0
        %714 = vmatpush1.xpose.msra.mxu0 0.0
        %715 = vmatprep.subr.mxu0 0.0
        %716 = vmatpush1.xpose.msra.mxu0 0.0
        %717 = vmatprep.subr.mxu0 0.0
        %718 = vmatpush1.xpose.msra.mxu0 0.0
        %719 = vmatprep.subr.mxu0 0.0
        %720 = vmatpush1.xpose.msra.mxu0 0.0
        %721 = vmatprep.subr.mxu0 0.0
        %722 = vmatpush1.xpose.msra.mxu0 0.0
        %723 = vmatprep.subr.mxu0 0.0
        %724 = vmatpush1.xpose.msra.mxu0 0.0
        %725 = vmatprep.subr.mxu0 0.0
        %726 = vmatpush1.xpose.msra.mxu0 0.0
        %727 = vmatprep.subr.mxu0 0.0
        %728 = vmatpush1.xpose.msra.mxu0 0.0
        %729 = vmatprep.subr.mxu0 0.0
        %730 = vmatpush1.xpose.msra.mxu0 0.0
        %731 = vmatprep.subr.mxu0 0.0
        %732 = vmatpush1.xpose.msra.mxu0 0.0
        %733 = vmatprep.subr.mxu0 0.0
        %734 = vmatpush1.xpose.msra.mxu0 0.0
        %735 = vmatprep.subr.mxu0 0.0
        %736 = vmatpush1.xpose.msra.mxu0 0.0
        %737 = vmatprep.subr.mxu0 0.0
        %738 = vmatpush1.xpose.msra.mxu0 0.0
        %739 = vmatprep.subr.mxu0 0.0
        %740 = vmatpush1.xpose.msra.mxu0 0.0
        %741 = vmatprep.subr.mxu0 0.0
        %742 = vmatpush1.xpose.msra.mxu0 0.0
        %743 = vmatprep.subr.mxu0 0.0
        %744 = vmatpush1.xpose.msra.mxu0 0.0
        %745 = vmatprep.subr.mxu0 0.0
        %746 = vmatpush1.xpose.msra.mxu0 0.0
        %747 = vmatprep.subr.mxu0 0.0
        %748 = vmatpush1.xpose.msra.mxu0 0.0
        %749 = vmatprep.subr.mxu0 0.0
        %750 = vmatpush1.xpose.msra.mxu0 0.0
        %751 = vmatprep.subr.mxu0 0.0
        %752 = vmatpush1.xpose.msra.mxu0 0.0
        %753 = vmatprep.subr.mxu0 0.0
        %754 = vmatpush1.xpose.msra.mxu0 0.0
        %755 = vmatprep.subr.mxu0 0.0
        %756 = vmatpush1.xpose.msra.mxu0 0.0
        %757 = vmatprep.subr.mxu0 0.0
        %758 = vmatpush1.xpose.msra.mxu0 0.0
        %759 = vmatprep.subr.mxu0 0.0
        %760 = vmatpush1.xpose.msra.mxu0 0.0
        %761 = vmatprep.subr.mxu0 0.0
        %762 = vmatpush1.xpose.msra.mxu0 0.0
        %763 = vmatprep.mubr.f32.mxu0 0.0
        %764 = vmatmul.mubr.f32.gmra.mrb[0].mxu0 %v694
        %v765 = vpop.f32.mrb[0].mxu0
        %v766 = vadd.f32 0.0, %v765
        %v767 = vpop.f32.mrb[0].mxu0
        %768 = vdwg.mxu0
        %v769 = vsel %vm692, %v766, -inf
        %770 = vmax.xlane.f32.xlu0 %v769
        %v771 = vpop.xlane.xlu0 %770
        %v772 = vsub.f32 %v766, %v771
        %v773 = vmul.f32 %v772, 1.442695
        %v774 = vpow.pop %v773
        %v775 = vsel %vm692, %v774, 0.0
        %776 = vadd.xlane.f32.xlu0 %v775
        %v777 = vpop.xlane.xlu0 %776
        %v778 = vmul.f32 %v777, 0.125
        %vm779 = vcmp.ge.f32.partialorder %v774, %v778
        %v780 = vsel %vm779, %v774, 0.0
        %v781 = vsel %vm692, %v780, 0.0
        %782 = vadd.xlane.f32.xlu0 %v781
        %v783 = vpop.xlane.xlu0 %782
        %v785 = vsel %vm692, %v780, 0
        %787 = vmatprep.subr.mxu0 0.0
        %788 = vmatpush1.msra.mxu0 %v689
        %789 = vmatprep.subr.mxu0 0.0
        %790 = vmatpush1.msra.mxu0 0.0
        %791 = vmatprep.subr.mxu0 0.0
        %792 = vmatpush1.msra.mxu0 0.0
        %793 = vmatprep.subr.mxu0 0.0
        %794 = vmatpush1.msra.mxu0 0.0
        %795 = vmatprep.subr.mxu0 0.0
        %796 = vmatpush1.msra.mxu0 0.0
        %797 = vmatprep.subr.mxu0 0.0
        %798 = vmatpush1.msra.mxu0 0.0
        %799 = vmatprep.subr.mxu0 0.0
        %800 = vmatpush1.msra.mxu0 0.0
        %801 = vmatprep.subr.mxu0 0.0
        %802 = vmatpush1.msra.mxu0 0.0
        %803 = vmatprep.subr.mxu0 0.0
        %804 = vmatpush1.msra.mxu0 0.0
        %805 = vmatprep.subr.mxu0 0.0
        %806 = vmatpush1.msra.mxu0 0.0
        %807 = vmatprep.subr.mxu0 0.0
        %808 = vmatpush1.msra.mxu0 0.0
        %809 = vmatprep.subr.mxu0 0.0
        %810 = vmatpush1.msra.mxu0 0.0
        %811 = vmatprep.subr.mxu0 0.0
        %812 = vmatpush1.msra.mxu0 0.0
        %813 = vmatprep.subr.mxu0 0.0
        %814 = vmatpush1.msra.mxu0 0.0
        %815 = vmatprep.subr.mxu0 0.0
        %816 = vmatpush1.msra.mxu0 0.0
        %817 = vmatprep.subr.mxu0 0.0
        %818 = vmatpush1.msra.mxu0 0.0
        %819 = vmatprep.subr.mxu0 0.0
        %820 = vmatpush1.msra.mxu0 0.0
        %821 = vmatprep.subr.mxu0 0.0
        %822 = vmatpush1.msra.mxu0 0.0
        %823 = vmatprep.subr.mxu0 0.0
        %824 = vmatpush1.msra.mxu0 0.0
        %825 = vmatprep.subr.mxu0 0.0
        %826 = vmatpush1.msra.mxu0 0.0
        %827 = vmatprep.subr.mxu0 0.0
        %828 = vmatpush1.msra.mxu0 0.0
        %829 = vmatprep.subr.mxu0 0.0
        %830 = vmatpush1.msra.mxu0 0.0
        %831 = vmatprep.subr.mxu0 0.0
        %832 = vmatpush1.msra.mxu0 0.0
        %833 = vmatprep.subr.mxu0 0.0
        %834 = vmatpush1.msra.mxu0 0.0
        %835 = vmatprep.subr.mxu0 0.0
        %836 = vmatpush1.msra.mxu0 0.0
        %837 = vmatprep.subr.mxu0 0.0
        %838 = vmatpush1.msra.mxu0 0.0
        %839 = vmatprep.subr.mxu0 0.0
        %840 = vmatpush1.msra.mxu0 0.0
        %841 = vmatprep.subr.mxu0 0.0
        %842 = vmatpush1.msra.mxu0 0.0
        %843 = vmatprep.subr.mxu0 0.0
        %844 = vmatpush1.msra.mxu0 0.0
        %845 = vmatprep.subr.mxu0 0.0
        %846 = vmatpush1.msra.mxu0 0.0
        %847 = vmatprep.subr.mxu0 0.0
        %848 = vmatpush1.msra.mxu0 0.0
        %849 = vmatprep.subr.mxu0 0.0
        %850 = vmatpush1.msra.mxu0 0.0
        %851 = vmatprep.mubr.f32.mxu0 0.0
        %852 = vmatmul.mubr.f32.gmra.mrb[0].mxu0 %v785
        %v853 = vpop.f32.mrb[0].mxu0
        %v854 = vadd.f32 0.0, %v853
        %v855 = vpop.f32.mrb[0].mxu0
        %856 = vdwg.mxu0
        %v857 = vrcp.pop %v783
        %v858 = vmul.f32 %v854, %v857
        %v859 = vld [vmem:[#allocation2] sm:$0xff]
        %v860 = vld [vmem:[%s450] sm:$0xff]
        %v862 = vsel %vm692, %v858, 0
        %864 = vmatprep.subr.mxu0 0.0
        %865 = vmatpush1.msra.mxu0 %v860
        %866 = vmatprep.subr.mxu0 0.0
        %867 = vmatpush1.msra.mxu0 0.0
        %868 = vmatprep.subr.mxu0 0.0
        %869 = vmatpush1.msra.mxu0 0.0
        %870 = vmatprep.subr.mxu0 0.0
        %871 = vmatpush1.msra.mxu0 0.0
        %872 = vmatprep.subr.mxu0 0.0
        %873 = vmatpush1.msra.mxu0 0.0
        %874 = vmatprep.subr.mxu0 0.0
        %875 = vmatpush1.msra.mxu0 0.0
        %876 = vmatprep.subr.mxu0 0.0
        %877 = vmatpush1.msra.mxu0 0.0
        %878 = vmatprep.subr.mxu0 0.0
        %879 = vmatpush1.msra.mxu0 0.0
        %880 = vmatprep.subr.mxu0 0.0
        %881 = vmatpush1.msra.mxu0 0.0
        %882 = vmatprep.subr.mxu0 0.0
        %883 = vmatpush1.msra.mxu0 0.0
        %884 = vmatprep.subr.mxu0 0.0
        %885 = vmatpush1.msra.mxu0 0.0
        %886 = vmatprep.subr.mxu0 0.0
        %887 = vmatpush1.msra.mxu0 0.0
        %888 = vmatprep.subr.mxu0 0.0
        %889 = vmatpush1.msra.mxu0 0.0
        %890 = vmatprep.subr.mxu0 0.0
        %891 = vmatpush1.msra.mxu0 0.0
        %892 = vmatprep.subr.mxu0 0.0
        %893 = vmatpush1.msra.mxu0 0.0
        %894 = vmatprep.subr.mxu0 0.0
        %895 = vmatpush1.msra.mxu0 0.0
        %896 = vmatprep.subr.mxu0 0.0
        %897 = vmatpush1.msra.mxu0 0.0
        %898 = vmatprep.subr.mxu0 0.0
        %899 = vmatpush1.msra.mxu0 0.0
        %900 = vmatprep.subr.mxu0 0.0
        %901 = vmatpush1.msra.mxu0 0.0
        %902 = vmatprep.subr.mxu0 0.0
        %903 = vmatpush1.msra.mxu0 0.0
        %904 = vmatprep.subr.mxu0 0.0
        %905 = vmatpush1.msra.mxu0 0.0
        %906 = vmatprep.subr.mxu0 0.0
        %907 = vmatpush1.msra.mxu0 0.0
        %908 = vmatprep.subr.mxu0 0.0
        %909 = vmatpush1.msra.mxu0 0.0
        %910 = vmatprep.subr.mxu0 0.0
        %911 = vmatpush1.msra.mxu0 0.0
        %912 = vmatprep.subr.mxu0 0.0
        %913 = vmatpush1.msra.mxu0 0.0
        %914 = vmatprep.subr.mxu0 0.0
        %915 = vmatpush1.msra.mxu0 0.0
        %916 = vmatprep.subr.mxu0 0.0
        %917 = vmatpush1.msra.mxu0 0.0
        %918 = vmatprep.subr.mxu0 0.0
        %919 = vmatpush1.msra.mxu0 0.0
        %920 = vmatprep.subr.mxu0 0.0
        %921 = vmatpush1.msra.mxu0 0.0
        %922 = vmatprep.subr.mxu0 0.0
        %923 = vmatpush1.msra.mxu0 0.0
        %924 = vmatprep.subr.mxu0 0.0
        %925 = vmatpush1.msra.mxu0 0.0
        %926 = vmatprep.subr.mxu0 0.0
        %927 = vmatpush1.msra.mxu0 0.0
        %928 = vmatprep.mubr.f32.mxu0 0.0
        %929 = vmatmul.mubr.f32.gmra.mrb[0].mxu0 %v862
        %v930 = vpop.f32.mrb[0].mxu0
        %v931 = vadd.f32 0.0, %v930
        %v932 = vpop.f32.mrb[0].mxu0
        %933 = vdwg.mxu0
        %v934 = vadd.f32 %v859, %v931
        %935 = vst.msk [vmem:[#allocation2] sm:$0xff] %vm464, %v934
        %p936 = scmp.eq.s32.totalorder %s28, 3
        // Predicated region
        $region61: #{tpu_custom_call.1} parent=55 // pred_check
          %p937 = pneg %p936
        $region62: #{tpu_custom_call.1} parent=55 // pred_check_branch
          %939 = sbr.rel (%p937) target = $region64
        $region63: #{tpu_custom_call.1} parent=55 // pred_region
          %v940 = vld [vmem:[#allocation2] sm:$0xff]
          %v941 = vadd.f32 %v940, %v457
          %v942 = vsel %vm464, %v941, 0.0
          %943 = vadd.xlane.f32.xlu0 %v942
          %v944 = vpop.xlane.xlu0 %943
          %v945 = vrcp.pop 32.0
          %v946 = vmul.f32 %v944, %v945
          %v947 = vsub.f32 %v941, %v946
          %v948 = vmul.f32 %v947, %v947
          %v949 = vsel %vm464, %v948, 0.0
          %950 = vadd.xlane.f32.xlu0 %v949
          %v951 = vpop.xlane.xlu0 %950
          %v952 = vmul.f32 %v951, %v945
          %v953 = vadd.f32 %v952, 1e-06
          %v954 = vrsqrt.pop %v953
          %v955 = vmul.f32 %v947, %v954
          %v956 = vld [vmem:[%s7] sm:$0x1]
          %v958 = vlaneseq
          %v959 = vshrl.u32 %v958, 7
          %v960 = vsub.s32 0, %v959
          %v961 = vrot.slane %v956, %v960
          %v963 = vmul.f32 %v955, %v961
          %v964 = vld [vmem:[%s8] sm:$0x1]
          %v966 = vlaneseq
          %v967 = vshrl.u32 %v966, 7
          %v968 = vsub.s32 0, %v967
          %v969 = vrot.slane %v964, %v968
          %v971 = vadd.f32 %v963, %v969
          %972 = vst.msk [vmem:[%s419] sm:$0xff] %vm464, %v971
        $region64: #{tpu_custom_call.1} parent=55 // pred_fallthru
          _
        %s973 = sand.u32 %s267, 1
        %s974 = scalar_lea.sflag [#allocation4], %s973
        %s975 = sand.u32 %s267, 1
        %s976 = smul.addr %s975, 8
        %s977 = scalar_lea.vmem [#allocation3], %s976
        // Predicated region
        $region65: #{tpu_custom_call.1} parent=55 // pred_check
          %p978 = pneg %p277
        $region66: #{tpu_custom_call.1} parent=55 // pred_check_branch
          %980 = sbr.rel (%p978) target = $region68
        $region67: #{tpu_custom_call.1} parent=55 // pred_region
          %s982 = ssub.s32 128, 128
          %983 = vsyncadd %s974, %s982
          %s984 = smul.addr %s27, 128
          %s985 = scalar_lea.hbm %s9, %s984
          %s987 = sshll.u32 %s977, 4
          %s988 = int_to_ptr.vmem [resolvable:$true] %s987
          %990 = dma.vmem_to_hbm [thread:$0]  %s988, 128, %s985, %s974
        $region68: #{tpu_custom_call.1} parent=55 // pred_fallthru
          _
      $region56: #{tpu_custom_call.1} parent=5 // pred_fallthru
        _
      %p991 = scmp.le.s32.totalorder 2, %s18
      // Predicated region
      $region69: #{tpu_custom_call.1} parent=5 // pred_check
        %p992 = pneg %p991
      $region70: #{tpu_custom_call.1} parent=5 // pred_check_branch
        %994 = sbr.rel (%p992) target = $region72
      $region71: #{tpu_custom_call.1} parent=5 // pred_region
        %s995 = ssub.s32 %s18, 2
        // Predicated region
        $region73: #{tpu_custom_call.1} parent=71 // pred_check
          %p996 = pneg %p283
        $region74: #{tpu_custom_call.1} parent=71 // pred_check_branch
          %998 = sbr.rel (%p996) target = $region76
        $region75: #{tpu_custom_call.1} parent=71 // pred_region
          %s999 = sand.u32 %s268, 1
          %s1000 = scalar_lea.sflag [#allocation4], %s999
          %s1001 = sand.u32 %s268, 1
          %s1002 = smul.addr %s1001, 8
          %s1003 = scalar_lea.vmem [#allocation3], %s1002
          %1004 = dma.done %s1000, 128
        $region76: #{tpu_custom_call.1} parent=71 // pred_fallthru
          _
      $region72: #{tpu_custom_call.1} parent=5 // pred_fallthru
        _
    $region6: #{tpu_custom_call.1} parent=1 // loop_footer
      %s22 = sadd.s32 1, %s18
    $region7: #{tpu_custom_call.1} parent=1 // loop_footer_branch
      %17 = sbr.rel target = $region3
    $region8: #{tpu_custom_call.1} parent=1 // loop_exit
      _
    %1005 = vsyncpa [#allocation4], 1
    %s1006 = scalar_lea.sflag [#allocation4], 1
    %1007 = vsyncpa %s1006, 1

</llo_original>
